<compile_context>
chip_gen: v5e
topology: v5e:2x2
jax: 0.10.0
libtpu: 0.0.40
codegen_flags: <defaults>
</compile_context>

<pallas_src>
import functools

import numpy as np
import jax
import jax.numpy as jnp
from jax import lax
from jax.experimental import pallas as pl
from jax.experimental.pallas import tpu as pltpu


_LANE = 128
_MAX_TILE_N = 65536     # clamp on samples per grid step (lane axis), multiple of 128


def _tpu_vmem_capacity_bytes():
    """Physical per-core VMEM; conservative v7x-safe fallback (64 MiB)."""
    try:
        return int(pltpu.get_tpu_info().vmem_capacity_bytes)
    except Exception:
        return 64 * 1024 * 1024


def _tpu_num_tensorcores():
    """2 on chips where a 'parallel' grid axis shards across TensorCores
    (v4 / v5p / v7x); 1 on single-TensorCore chips (v5e / v6e)."""
    try:
        kind = jax.devices()[0].device_kind.lower()
    except Exception:
        return 1
    if ("v7" in kind) or ("tpu7" in kind) or ("v4" in kind) or ("v5p" in kind):
        return 2
    return 1


def _round_up(v, m):
    return ((v + m - 1) // m) * m


# --------------------------------------------------------------------------- #
# Kernel                                                                       #
# --------------------------------------------------------------------------- #
def _loss_kernel(logits_ref, labels_ref,
                 loss_ref, cls_cor_ref, cls_cnt_ref,
                 s_loss, s_cor, s_cnt,
                 *, n_samples, tile_n, tiles_per_core):
    p = pl.program_id(0)
    t = pl.program_id(1)

    @pl.when(t == 0)
    def _init():
        s_loss[...] = jnp.zeros_like(s_loss)
        s_cor[...] = jnp.zeros_like(s_cor)
        s_cnt[...] = jnp.zeros_like(s_cnt)

    lbl_raw = labels_ref[...]                                   # (1, TN) int32
    c = logits_ref.shape[0]

    # Global column ids, built from the *unclamped* tile index so duplicated /
    # past-the-end tail tiles contribute exactly zero.
    col = (p * tiles_per_core + t) * tile_n + lax.broadcasted_iota(
        jnp.int32, lbl_raw.shape, 1)                            # (1, TN)
    col_ok = col < n_samples

    # Sanitize garbage tail columns (partial last block) before any math.
    x = jnp.where(col_ok, logits_ref[...].astype(jnp.float32), 0.0)   # (C, TN)
    lbl = jnp.where(col_ok, lbl_raw, -1)

    cls_idx = lax.broadcasted_iota(jnp.int32, x.shape, 0)
    oh_f = (cls_idx == lbl).astype(jnp.float32)                 # one-hot; 0 if ignored

    # Numerically stable per-sample NLL: logsumexp(x) - x[label].
    col_max = jnp.max(x, axis=0, keepdims=True)                 # (1, TN)
    shifted = x - col_max
    lse = jnp.log(jnp.sum(jnp.exp(shifted), axis=0, keepdims=True))      # (1, TN)
    sel = jnp.sum(shifted * oh_f, axis=0, keepdims=True)        # x[label] - max (0 if ignored)

    # Labels outside {-1} ∪ [0, C) are treated like ignore_index (torch raises).
    valid = jnp.logical_and(lbl >= 0, lbl < c).astype(jnp.float32)
    # "Prediction correct" <=> the label's logit attains the column max.
    # (Differs from torch argmax-first tie-breaking only on exact logit ties.)
    correct = (sel == 0.0).astype(jnp.float32)

    s_loss[...] += (lse - sel) * valid
    s_cnt[...] += oh_f
    s_cor[...] += oh_f * correct

    @pl.when(t == pl.num_programs(1) - 1)
    def _flush():
        loss_ref[0] = jnp.sum(s_loss[...], keepdims=True)               # (1, 1)
        cls_cor_ref[0] = jnp.sum(s_cor[...], axis=1, keepdims=True)     # (C, 1)
        cls_cnt_ref[0] = jnp.sum(s_cnt[...], axis=1, keepdims=True)     # (C, 1)


# --------------------------------------------------------------------------- #
# Tiling selection (generation-aware)                                          #
# --------------------------------------------------------------------------- #
def _choose_tiling(n, c, itemsize, num_cores):
    pad_c = _round_up(max(c, 1), 8)
    # per-lane VMEM bytes: 2x double-buffered logits + 2x labels (8-sublane i32)
    # + scratch (loss @ 8 sublanes, per-class cor/cnt) + ~8 live (pad_c, TN) temps
    per_lane = (2 * pad_c * itemsize) + (2 * 8 * 4) \
        + (8 * 4 + 2 * pad_c * 4) + (8 * pad_c * 4)
    budget = (_tpu_vmem_capacity_bytes() * 2) // 5      # ~40% of physical VMEM
    cap = max(_LANE, min(_MAX_TILE_N, (budget // per_lane) // _LANE * _LANE))

    cores = num_cores if n >= 2048 * num_cores else 1
    if cores == 1 and n <= cap:
        tile_n = max(n, 1)                              # single exact block
    else:
        tile_n = min(cap, _round_up(pl.cdiv(n, cores), _LANE))
    num_tiles = pl.cdiv(n, tile_n)
    tiles_per_core = pl.cdiv(num_tiles, cores)
    return tile_n, cores, tiles_per_core, num_tiles


# --------------------------------------------------------------------------- #
# pallas_call wrapper                                                          #
# --------------------------------------------------------------------------- #
@functools.partial(
    jax.jit,
    static_argnames=("tile_n", "num_cores", "tiles_per_core", "num_tiles"))
def _loss_stats_pallas(logits, labels, *, tile_n, num_cores, tiles_per_core,
                       num_tiles):
    n, c = logits.shape

    # TODO(synk): ideally the producing classifier head emits logits as (C, N)
    # directly (swap the matmul operands); until then this transpose is the one
    # remaining extra HBM pass (no pad, no upcast).
    logits_t = logits.T                                  # (C, N) lane-dense
    labels2d = labels.reshape(1, n).astype(jnp.int32)

    last_tile = num_tiles - 1
    data_map = lambda p, t: (0, jnp.minimum(p * tiles_per_core + t, last_tile))
    out_map = lambda p, t: (p, 0, 0)

    kernel = functools.partial(_loss_kernel, n_samples=n, tile_n=tile_n,
                               tiles_per_core=tiles_per_core)

    cap_bytes = _tpu_vmem_capacity_bytes()
    vmem_limit = max(32 * 1024 * 1024,
                     min(cap_bytes - 8 * 1024 * 1024,
                         (cap_bytes * 2) // 5 + 16 * 1024 * 1024))

    outs = pl.pallas_call(
        kernel,
        out_shape=(
            jax.ShapeDtypeStruct((num_cores, 1, 1), jnp.float32),   # sum NLL (valid rows)
            jax.ShapeDtypeStruct((num_cores, c, 1), jnp.float32),   # per-class correct
            jax.ShapeDtypeStruct((num_cores, c, 1), jnp.float32),   # per-class count
        ),
        grid_spec=pltpu.PrefetchScalarGridSpec(
            num_scalar_prefetch=0,
            grid=(num_cores, tiles_per_core),
            in_specs=[
                pl.BlockSpec((c, tile_n), data_map),   # native dtype, cast in-kernel
                pl.BlockSpec((1, tile_n), data_map),
            ],
            out_specs=[
                pl.BlockSpec((1, 1, 1), out_map),
                pl.BlockSpec((1, c, 1), out_map),
                pl.BlockSpec((1, c, 1), out_map),
            ],
            scratch_shapes=[
                pltpu.VMEM((1, tile_n), jnp.float32),
                pltpu.VMEM((c, tile_n), jnp.float32),
                pltpu.VMEM((c, tile_n), jnp.float32),
            ],
        ),
        compiler_params=pltpu.CompilerParams(
            dimension_semantics=("parallel", "arbitrary"),
            vmem_limit_bytes=vmem_limit,
        ),
    )(logits_t, labels2d)

    loss_p, cor_p, cnt_p = outs
    cls_cor = jnp.sum(cor_p, axis=0)[:, 0]               # (C,)
    cls_cnt = jnp.sum(cnt_p, axis=0)[:, 0]               # (C,)
    valid_cnt = jnp.sum(cls_cnt)
    correct_cnt = jnp.sum(cls_cor)

    loss = jnp.sum(loss_p) / jnp.maximum(valid_cnt, 1.0)     # mean over non-ignored
    accuracy = correct_cnt / jnp.float32(n)                  # module divides by total N
    acc_per_class = cls_cor / jnp.maximum(cls_cnt, 1.0)
    return loss, accuracy, acc_per_class


# --------------------------------------------------------------------------- #
# Module-equivalent forward                                                    #
# --------------------------------------------------------------------------- #
def single_particle_loss_forward(out, type_labels):
    """Mirrors SingleParticleLoss.forward(out, type_labels)."""
    logits = out['logits']                                 # (N, C)
    labels_host = np.asarray(type_labels[0])               # caller-provided host data
    labels = jnp.asarray(labels_host, dtype=jnp.int32)     # (N,)
    n, c = logits.shape

    tile_n, cores, tpc, ntiles = _choose_tiling(
        n, c, logits.dtype.itemsize, _tpu_num_tensorcores())
    loss, accuracy, acc_per_class = _loss_stats_pallas(
        logits, labels, tile_n=tile_n, num_cores=cores,
        tiles_per_core=tpc, num_tiles=ntiles)

    res = {'loss': loss, 'accuracy': accuracy}
    # Per-class accuracy keys come from the host array the caller already gave
    # us (no device->host sync); values remain lazy device scalars.
    for cval in np.unique(labels_host):
        cval = int(cval)
        if 0 <= cval < c:
            res['accuracy_{}'.format(cval)] = acc_per_class[cval]
        else:
            # ignore_index (-1): argmax never produces -1
            res['accuracy_{}'.format(cval)] = jnp.asarray(0.0, dtype=jnp.float32)
    return res


# --------------------------------------------------------------------------- #
# Reference + tests                                                            #
# --------------------------------------------------------------------------- #
def _reference(logits, labels):
    """numpy reference of nn.CrossEntropyLoss(ignore_index=-1) + accuracies."""
    logits = np.asarray(logits, np.float32)
    labels = np.asarray(labels)
    valid = labels >= 0
    x = logits - logits.max(axis=1, keepdims=True)
    lse = np.log(np.exp(x).sum(axis=1))
    nll = lse - x[np.arange(len(labels)), np.clip(labels, 0, None)]
    loss = float((nll * valid).sum() / max(valid.sum(), 1))
    pred = logits.argmax(axis=1)
    acc = float((pred == labels).sum()) / float(labels.shape[0])
    cls = {}
    for cval in np.unique(labels):
        mask = labels == cval
        cls[int(cval)] = float((pred[mask] == labels[mask]).sum()) / float(mask.sum())
    return loss, acc, cls


def _check(loss, acc, acc_per_class, logits_np, labels_np, tag):
    ref_loss, ref_acc, ref_cls = _reference(logits_np, labels_np)
    assert np.allclose(float(loss), ref_loss, rtol=1e-5, atol=1e-5), \
        (tag, float(loss), ref_loss)
    assert np.allclose(float(acc), ref_acc, rtol=1e-6, atol=1e-6), \
        (tag, float(acc), ref_acc)
    acc_pc = np.asarray(acc_per_class)
    for cval, ref_c in ref_cls.items():
        if cval < 0:
            continue
        assert np.allclose(float(acc_pc[cval]), ref_c, rtol=1e-5, atol=1e-5), \
            (tag, cval, float(acc_pc[cval]), ref_c)


if __name__ == "__main__":
    key = jax.random.PRNGKey(0)
    k1, k2, k3, k4, k5, k6 = jax.random.split(key, 6)

    # --- main test: module-style forward on a small classifier output -------
    N, C = 64, 5
    logits = jax.random.normal(k1, (N, C), dtype=jnp.float32)
    labels = jax.random.randint(k2, (N,), -1, C, dtype=jnp.int32)   # includes -1

    res = single_particle_loss_forward({'logits': logits}, [np.asarray(labels)])
    res = jax.block_until_ready(res)

    ref_loss, ref_acc, ref_cls = _reference(np.asarray(logits), np.asarray(labels))
    assert np.allclose(float(res['loss']), ref_loss, rtol=1e-5, atol=1e-5)
    assert np.allclose(float(res['accuracy']), ref_acc, rtol=1e-6, atol=1e-6)
    for cval, acc_c in ref_cls.items():
        got = float(res['accuracy_{}'.format(cval)])
        assert np.allclose(got, acc_c, rtol=1e-5, atol=1e-5), (cval, got, acc_c)

    # --- ragged test: multiple tiles + partial last block -------------------
    N2, C2 = 1000, 7
    logits2 = jax.random.normal(k3, (N2, C2), dtype=jnp.float32)
    labels2 = jax.random.randint(k4, (N2,), -1, C2, dtype=jnp.int32)
    out2 = jax.block_until_ready(_loss_stats_pallas(
        logits2, labels2, tile_n=128, num_cores=1,
        tiles_per_core=pl.cdiv(pl.cdiv(N2, 128), 1), num_tiles=pl.cdiv(N2, 128)))
    _check(*out2, np.asarray(logits2), np.asarray(labels2), "ragged-1core")

    # --- ragged test: 2-core split with clamped (fully-masked) tail tiles ---
    N3, C3 = 1100, 3
    logits3 = jax.random.normal(k5, (N3, C3), dtype=jnp.float32)
    labels3 = jax.random.randint(k6, (N3,), -1, C3, dtype=jnp.int32)
    nt3 = pl.cdiv(N3, 128)
    out3 = jax.block_until_ready(_loss_stats_pallas(
        logits3, labels3, tile_n=128, num_cores=2,
        tiles_per_core=pl.cdiv(nt3, 2), num_tiles=nt3))
    _check(*out3, np.asarray(logits3), np.asarray(labels3), "ragged-2core")

    print("KERNEL_OK")
</pallas_src>

<mosaic_0001>
module attributes {stable_mosaic.version = 11 : i64} {
  func.func @_loss_kernel(%arg0: i32, %arg1: i32, %arg2: memref<5x64xf32, #tpu.memory_space<vmem>>, %arg3: memref<1x64xi32, #tpu.memory_space<vmem>>, %arg4: memref<1x1x1xf32, #tpu.memory_space<vmem>>, %arg5: memref<1x5x1xf32, #tpu.memory_space<vmem>>, %arg6: memref<1x5x1xf32, #tpu.memory_space<vmem>>, %arg7: memref<1x64xf32, #tpu.memory_space<vmem>>, %arg8: memref<5x64xf32, #tpu.memory_space<vmem>>, %arg9: memref<5x64xf32, #tpu.memory_space<vmem>>) attributes {dimension_semantics = [#tpu.dimension_semantics<parallel>, #tpu.dimension_semantics<arbitrary>], iteration_bounds = array<i64: 1, 1>, scalar_prefetch = 0 : i64, scratch_operands = 3 : i64, tpu.core_type = #tpu.core_type<tc>, window_params = [{transform_indices = @transform_0, window_bounds = array<i64: 5, 64>}, {transform_indices = @transform_1, window_bounds = array<i64: 1, 64>}, {transform_indices = @transform_2, window_bounds = array<i64: 1, 1, 1>}, {transform_indices = @transform_3, window_bounds = array<i64: 1, 5, 1>}, {transform_indices = @transform_4, window_bounds = array<i64: 1, 5, 1>}]} {
    %c0_i32 = arith.constant 0 : i32
    %0 = arith.cmpi eq, %arg1, %c0_i32 : i32
    %1 = arith.extui %0 : i1 to i32
    %c0_i32_0 = arith.constant 0 : i32
    %2 = arith.cmpi ne, %1, %c0_i32_0 : i32
    scf.if %2 {
      %cst_24 = arith.constant 0.000000e+00 : f32
      %62 = vector.broadcast %cst_24 : f32 to vector<1x64xf32>
      %c0_25 = arith.constant 0 : index
      %c0_26 = arith.constant 0 : index
      %63 = vector.load %arg7[%c0_25, %c0_26] : memref<1x64xf32, #tpu.memory_space<vmem>>, vector<1x64xf32>
      tpu.vector_store %arg7[%c0_25, %c0_26], %62 {strides = array<i32>} : memref<1x64xf32, #tpu.memory_space<vmem>>, vector<1x64xf32>,
      %cst_27 = arith.constant 0.000000e+00 : f32
      %64 = vector.broadcast %cst_27 : f32 to vector<5x64xf32>
      %c0_28 = arith.constant 0 : index
      %c0_29 = arith.constant 0 : index
      %65 = vector.load %arg8[%c0_28, %c0_29] : memref<5x64xf32, #tpu.memory_space<vmem>>, vector<5x64xf32>
      tpu.vector_store %arg8[%c0_28, %c0_29], %64 {strides = array<i32>} : memref<5x64xf32, #tpu.memory_space<vmem>>, vector<5x64xf32>,
      %cst_30 = arith.constant 0.000000e+00 : f32
      %66 = vector.broadcast %cst_30 : f32 to vector<5x64xf32>
      %c0_31 = arith.constant 0 : index
      %c0_32 = arith.constant 0 : index
      %67 = vector.load %arg9[%c0_31, %c0_32] : memref<5x64xf32, #tpu.memory_space<vmem>>, vector<5x64xf32>
      tpu.vector_store %arg9[%c0_31, %c0_32], %66 {strides = array<i32>} : memref<5x64xf32, #tpu.memory_space<vmem>>, vector<5x64xf32>,
    } else {
    }
    %c0 = arith.constant 0 : index
    %c0_1 = arith.constant 0 : index
    %3 = vector.load %arg3[%c0, %c0_1] : memref<1x64xi32, #tpu.memory_space<vmem>>, vector<1x64xi32>
    %c1_i32 = arith.constant 1 : i32
    %4 = arith.muli %arg0, %c1_i32 : i32
    %5 = arith.addi %4, %arg1 : i32
    %c64_i32 = arith.constant 64 : i32
    %6 = arith.muli %5, %c64_i32 : i32
    %7 = tpu.iota {dimensions = array<i32: 1>} : vector<1x64xi32>
    %8 = vector.broadcast %6 : i32 to vector<1x64xi32>
    %9 = arith.addi %8, %7 : vector<1x64xi32>
    %c64_i32_2 = arith.constant 64 : i32
    %10 = vector.broadcast %c64_i32_2 : i32 to vector<1x64xi32>
    %11 = arith.cmpi slt, %9, %10 : vector<1x64xi32>
    %c0_3 = arith.constant 0 : index
    %c0_4 = arith.constant 0 : index
    %12 = vector.load %arg2[%c0_3, %c0_4] : memref<5x64xf32, #tpu.memory_space<vmem>>, vector<5x64xf32>
    %cst = arith.constant 0.000000e+00 : f32
    %13 = vector.shape_cast %11 : vector<1x64xi1> to vector<1x64xi1>
    %14 = vector.broadcast %13 : vector<1x64xi1> to vector<5x64xi1>
    %15 = vector.broadcast %cst : f32 to vector<5x64xf32>
    %16 = arith.select %14, %12, %15 : vector<5x64xi1>, vector<5x64xf32>
    %c-1_i32 = arith.constant -1 : i32
    %17 = vector.broadcast %c-1_i32 : i32 to vector<1x64xi32>
    %18 = arith.select %11, %3, %17 : vector<1x64xi1>, vector<1x64xi32>
    %19 = tpu.iota {dimensions = array<i32: 0>} : vector<5x64xi32>
    %20 = vector.broadcast %18 : vector<1x64xi32> to vector<5x64xi32>
    %21 = arith.cmpi eq, %19, %20 : vector<5x64xi32>
    %22 = arith.extui %21 : vector<5x64xi1> to vector<5x64xi32>
    %23 = arith.sitofp %22 : vector<5x64xi32> to vector<5x64xf32>
    %cst_5 = arith.constant dense<0xFF800000> : vector<64xf32>
    %24 = vector.multi_reduction <maximumf>, %16, %cst_5 [0] : vector<5x64xf32> to vector<64xf32>
    %25 = vector.shape_cast %24 : vector<64xf32> to vector<1x64xf32>
    %26 = vector.broadcast %25 : vector<1x64xf32> to vector<5x64xf32>
    %27 = arith.subf %16, %26 : vector<5x64xf32>
    %28 = math.exp %27 : vector<5x64xf32>
    %cst_6 = arith.constant dense<0.000000e+00> : vector<64xf32>
    %29 = vector.multi_reduction <add>, %28, %cst_6 [0] : vector<5x64xf32> to vector<64xf32>
    %30 = vector.shape_cast %29 : vector<64xf32> to vector<1x64xf32>
    %31 = math.log %30 : vector<1x64xf32>
    %32 = arith.mulf %27, %23 : vector<5x64xf32>
    %cst_7 = arith.constant dense<0.000000e+00> : vector<64xf32>
    %33 = vector.multi_reduction <add>, %32, %cst_7 [0] : vector<5x64xf32> to vector<64xf32>
    %34 = vector.shape_cast %33 : vector<64xf32> to vector<1x64xf32>
    %c0_i32_8 = arith.constant 0 : i32
    %35 = vector.broadcast %c0_i32_8 : i32 to vector<1x64xi32>
    %36 = arith.cmpi sge, %18, %35 : vector<1x64xi32>
    %c5_i32 = arith.constant 5 : i32
    %37 = vector.broadcast %c5_i32 : i32 to vector<1x64xi32>
    %38 = arith.cmpi slt, %18, %37 : vector<1x64xi32>
    %39 = arith.andi %36, %38 : vector<1x64xi1>
    %40 = arith.extui %39 : vector<1x64xi1> to vector<1x64xi32>
    %41 = arith.sitofp %40 : vector<1x64xi32> to vector<1x64xf32>
    %cst_9 = arith.constant 0.000000e+00 : f32
    %42 = vector.broadcast %cst_9 : f32 to vector<1x64xf32>
    %43 = arith.cmpf oeq, %34, %42 : vector<1x64xf32>
    %44 = arith.extui %43 : vector<1x64xi1> to vector<1x64xi32>
    %45 = arith.sitofp %44 : vector<1x64xi32> to vector<1x64xf32>
    %c0_10 = arith.constant 0 : index
    %c0_11 = arith.constant 0 : index
    %46 = vector.load %arg7[%c0_10, %c0_11] : memref<1x64xf32, #tpu.memory_space<vmem>>, vector<1x64xf32>
    %47 = arith.subf %31, %34 : vector<1x64xf32>
    %48 = arith.mulf %47, %41 : vector<1x64xf32>
    %49 = arith.addf %46, %48 : vector<1x64xf32>
    %c0_12 = arith.constant 0 : index
    %c0_13 = arith.constant 0 : index
    %50 = vector.load %arg7[%c0_12, %c0_13] : memref<1x64xf32, #tpu.memory_space<vmem>>, vector<1x64xf32>
    tpu.vector_store %arg7[%c0_12, %c0_13], %49 {strides = array<i32>} : memref<1x64xf32, #tpu.memory_space<vmem>>, vector<1x64xf32>,
    %c0_14 = arith.constant 0 : index
    %c0_15 = arith.constant 0 : index
    %51 = vector.load %arg9[%c0_14, %c0_15] : memref<5x64xf32, #tpu.memory_space<vmem>>, vector<5x64xf32>
    %52 = arith.addf %51, %23 : vector<5x64xf32>
    %c0_16 = arith.constant 0 : index
    %c0_17 = arith.constant 0 : index
    %53 = vector.load %arg9[%c0_16, %c0_17] : memref<5x64xf32, #tpu.memory_space<vmem>>, vector<5x64xf32>
    tpu.vector_store %arg9[%c0_16, %c0_17], %52 {strides = array<i32>} : memref<5x64xf32, #tpu.memory_space<vmem>>, vector<5x64xf32>,
    %c0_18 = arith.constant 0 : index
    %c0_19 = arith.constant 0 : index
    %54 = vector.load %arg8[%c0_18, %c0_19] : memref<5x64xf32, #tpu.memory_space<vmem>>, vector<5x64xf32>
    %55 = vector.broadcast %45 : vector<1x64xf32> to vector<5x64xf32>
    %56 = arith.mulf %23, %55 : vector<5x64xf32>
    %57 = arith.addf %54, %56 : vector<5x64xf32>
    %c0_20 = arith.constant 0 : index
    %c0_21 = arith.constant 0 : index
    %58 = vector.load %arg8[%c0_20, %c0_21] : memref<5x64xf32, #tpu.memory_space<vmem>>, vector<5x64xf32>
    tpu.vector_store %arg8[%c0_20, %c0_21], %57 {strides = array<i32>} : memref<5x64xf32, #tpu.memory_space<vmem>>, vector<5x64xf32>,
    %c0_i32_22 = arith.constant 0 : i32
    %59 = arith.cmpi eq, %arg1, %c0_i32_22 : i32
    %60 = arith.extui %59 : i1 to i32
    %c0_i32_23 = arith.constant 0 : i32
    %61 = arith.cmpi ne, %60, %c0_i32_23 : i32
    scf.if %61 {
      %c0_24 = arith.constant 0 : index
      %c0_25 = arith.constant 0 : index
      %62 = vector.load %arg7[%c0_24, %c0_25] : memref<1x64xf32, #tpu.memory_space<vmem>>, vector<1x64xf32>
      %63 = vector.shape_cast %62 : vector<1x64xf32> to vector<1x1x64xf32>
      %cst_26 = arith.constant dense<0.000000e+00> : vector<1xf32>
      %64 = vector.multi_reduction <add>, %63, %cst_26 [1, 2] : vector<1x1x64xf32> to vector<1xf32>
      %65 = vector.shape_cast %64 : vector<1xf32> to vector<1x1x1xf32>
      %66 = vector.extract %65[0, 0, 0] : f32 from vector<1x1x1xf32>
      %67 = vector.broadcast %66 : f32 to vector<1x1xf32>
      %c0_27 = arith.constant 0 : index
      %c0_28 = arith.constant 0 : index
      %c0_29 = arith.constant 0 : index
      %68 = vector.load %arg4[%c0_27, %c0_28, %c0_29] : memref<1x1x1xf32, #tpu.memory_space<vmem>>, vector<1x1x1xf32>
      %69 = vector.shape_cast %68 : vector<1x1x1xf32> to vector<1x1xf32>
      %70 = vector.shape_cast %67 : vector<1x1xf32> to vector<1x1x1xf32>
      tpu.vector_store %arg4[%c0_27, %c0_28, %c0_29], %70 {strides = array<i32>} : memref<1x1x1xf32, #tpu.memory_space<vmem>>, vector<1x1x1xf32>,
      %c0_30 = arith.constant 0 : index
      %c0_31 = arith.constant 0 : index
      %71 = vector.load %arg8[%c0_30, %c0_31] : memref<5x64xf32, #tpu.memory_space<vmem>>, vector<5x64xf32>
      %cst_32 = arith.constant dense<0.000000e+00> : vector<5xf32>
      %72 = vector.multi_reduction <add>, %71, %cst_32 [1] : vector<5x64xf32> to vector<5xf32>
      %73 = vector.shape_cast %72 : vector<5xf32> to vector<5x1xf32>
      %c0_33 = arith.constant 0 : index
      %c0_34 = arith.constant 0 : index
      %c0_35 = arith.constant 0 : index
      %74 = vector.load %arg5[%c0_33, %c0_34, %c0_35] : memref<1x5x1xf32, #tpu.memory_space<vmem>>, vector<1x5x1xf32>
      %75 = vector.shape_cast %74 : vector<1x5x1xf32> to vector<5x1xf32>
      %76 = vector.shape_cast %73 : vector<5x1xf32> to vector<1x5x1xf32>
      tpu.vector_store %arg5[%c0_33, %c0_34, %c0_35], %76 {strides = array<i32>} : memref<1x5x1xf32, #tpu.memory_space<vmem>>, vector<1x5x1xf32>,
      %c0_36 = arith.constant 0 : index
      %c0_37 = arith.constant 0 : index
      %77 = vector.load %arg9[%c0_36, %c0_37] : memref<5x64xf32, #tpu.memory_space<vmem>>, vector<5x64xf32>
      %cst_38 = arith.constant dense<0.000000e+00> : vector<5xf32>
      %78 = vector.multi_reduction <add>, %77, %cst_38 [1] : vector<5x64xf32> to vector<5xf32>
      %79 = vector.shape_cast %78 : vector<5xf32> to vector<5x1xf32>
      %c0_39 = arith.constant 0 : index
      %c0_40 = arith.constant 0 : index
      %c0_41 = arith.constant 0 : index
      %80 = vector.load %arg6[%c0_39, %c0_40, %c0_41] : memref<1x5x1xf32, #tpu.memory_space<vmem>>, vector<1x5x1xf32>
      %81 = vector.shape_cast %80 : vector<1x5x1xf32> to vector<5x1xf32>
      %82 = vector.shape_cast %79 : vector<5x1xf32> to vector<1x5x1xf32>
      tpu.vector_store %arg6[%c0_39, %c0_40, %c0_41], %82 {strides = array<i32>} : memref<1x5x1xf32, #tpu.memory_space<vmem>>, vector<1x5x1xf32>,
    } else {
    }
    return
  }
  func.func @transform_0(%arg0: i32, %arg1: i32) -> (i32, i32) {
    %c1_i32 = arith.constant 1 : i32
    %0 = arith.muli %arg0, %c1_i32 : i32
    %1 = arith.addi %0, %arg1 : i32
    %c0_i32 = arith.constant 0 : i32
    %2 = arith.minsi %1, %c0_i32 : i32
    %c0_i32_0 = arith.constant 0 : i32
    %c0_i32_1 = arith.constant 0 : i32
    return %c0_i32_0, %2 : i32, i32
  }
  func.func @transform_1(%arg0: i32, %arg1: i32) -> (i32, i32) {
    %c1_i32 = arith.constant 1 : i32
    %0 = arith.muli %arg0, %c1_i32 : i32
    %1 = arith.addi %0, %arg1 : i32
    %c0_i32 = arith.constant 0 : i32
    %2 = arith.minsi %1, %c0_i32 : i32
    %c0_i32_0 = arith.constant 0 : i32
    %c0_i32_1 = arith.constant 0 : i32
    return %c0_i32_0, %2 : i32, i32
  }
  func.func @transform_2(%arg0: i32, %arg1: i32) -> (i32, i32, i32) {
    %c0_i32 = arith.constant 0 : i32
    %c0_i32_0 = arith.constant 0 : i32
    %c0_i32_1 = arith.constant 0 : i32
    return %arg0, %c0_i32, %c0_i32_0 : i32, i32, i32
  }
  func.func @transform_3(%arg0: i32, %arg1: i32) -> (i32, i32, i32) {
    %c0_i32 = arith.constant 0 : i32
    %c0_i32_0 = arith.constant 0 : i32
    %c0_i32_1 = arith.constant 0 : i32
    return %arg0, %c0_i32, %c0_i32_0 : i32, i32, i32
  }
  func.func @transform_4(%arg0: i32, %arg1: i32) -> (i32, i32, i32) {
    %c0_i32 = arith.constant 0 : i32
    %c0_i32_0 = arith.constant 0 : i32
    %c0_i32_1 = arith.constant 0 : i32
    return %arg0, %c0_i32, %c0_i32_0 : i32, i32, i32
  }
}

</mosaic_0001>

<llo_original>
// kernel: _loss_stats_pallas.1
$region0: #{_loss_stats_pallas.1}
  #allocation0 [shape = 'u32[]', space=smem, size = 0x4, offset = 0x4, fixed_abs, tag = 'smem constant byte address 0x4 - core index']
  #allocation1 [shape = 'u32[72,128]{1,0:T(1,128)}', space=vmem, size = 0x9000, scoped, tag = 'internal scratch']
  #allocation2 [shape = 'f32[1,64]{1,0:T(1,128)}', space=vmem, size = 0x200, scoped, tag = 'scratch operand']
  #allocation3 [shape = 'f32[5,64]{1,0:T(8,128)}', space=vmem, size = 0x1000, scoped, tag = 'scratch operand']
  #allocation4 [shape = 'f32[5,64]{1,0:T(8,128)}', space=vmem, size = 0x1000, scoped, tag = 'scratch operand']
  %s0 = inlined_call_operand.hbm [shape: f32[5,64], index: 0, kind: input, shape index: {}]
  %s1 = inlined_call_operand.vmem [shape: s32[1,64], index: 1, kind: input, shape index: {}]
  %s2 = inlined_call_operand.hbm [shape: f32[1,1,1], index: 2, kind: output, shape index: {0}]
  %s3 = inlined_call_operand.vmem [shape: f32[1,5,1], index: 3, kind: output, shape index: {1}]
  %s4 = inlined_call_operand.vmem [shape: f32[1,5,1], index: 4, kind: output, shape index: {2}]
  %5 = xla_tuple %s2, %s3, %s4
  %s6 = sld [smem:[#allocation0]]
  $region46: #{_loss_stats_pallas.1} parent=0
    _
  %s8 = ssub.s32 1, %s6
  %s9 = scalar_select 0, %s8, %s6
  $region1: #{_loss_stats_pallas.1} parent=0
    #allocation5 [shape = 'u8[4096]{0}', space=vmem, size = 0x1000, scoped, tag = 'input window, operand 0, single buffered']
    #allocation6 [shape = 's32[1]{0}', space=sflag, size = 0x4, scoped, tag = 'scoped memory for _loss_stats_pallas.1']
    #allocation7 [shape = 's32[1]{0}', space=sflag, size = 0x4, scoped, tag = 'scoped memory for _loss_stats_pallas.1']
    #allocation8 [shape = 'u8[512]{0}', space=vmem, size = 0x400, scoped, tag = 'output window, operand 0, single buffered']
    %10 = vsyncpa [#allocation6], 0
    %11 = vsyncpa [#allocation7], 0
    // Predicated region
    $region2: #{_loss_stats_pallas.1} parent=1 // pred_check
      _
    $region3: #{_loss_stats_pallas.1} parent=1 // pred_check_branch
      %13 = sbr.rel (0) target = $region5
    $region4: #{_loss_stats_pallas.1} parent=1 // pred_region
      %s14 = sadd.s32 0, 0
      %p15 = scmp.lt.s32.totalorder %s14, 0
      %s16 = scalar_select %p15, %s14, 0
      %18 = vsyncadd [#allocation6], 0
      %s19 = smul.addr %s16, 8
      %s20 = scalar_lea.hbm %s0, %s19
      %s22 = sshll.u32 %s20, 4
      %s23 = int_to_ptr.hbm [resolvable:$true] %s22
      %s24 = sshll.u32 [#allocation5], 4
      %s25 = int_to_ptr.vmem [resolvable:$true] %s24
      %27 = dma.hbm_to_vmem [thread:$0]  %s23, 128, %s25, [#allocation6]
    $region5: #{_loss_stats_pallas.1} parent=1 // pred_fallthru
      _
    // Predicated region
    $region6: #{_loss_stats_pallas.1} parent=1 // pred_check
      _
    $region7: #{_loss_stats_pallas.1} parent=1 // pred_check_branch
      %29 = sbr.rel (0) target = $region9
    $region8: #{_loss_stats_pallas.1} parent=1 // pred_region
      %s30 = sadd.s32 0, 0
      %p31 = scmp.lt.s32.totalorder %s30, 0
      %s32 = scalar_select %p31, %s30, 0
      %p33 = scmp.lt.s32.totalorder %s32, 0
      %s34 = scalar_select %p33, %s32, 0
      %s35 = scalar_lea.vmem %s1, %s34
      %s36 = sadd.s32 0, 0
      %p37 = scmp.lt.s32.totalorder %s36, 0
      %s38 = scalar_select %p37, %s36, 0
    $region9: #{_loss_stats_pallas.1} parent=1 // pred_fallthru
      _
    // Predicated region
    $region10: #{_loss_stats_pallas.1} parent=1 // pred_check
      _
    $region11: #{_loss_stats_pallas.1} parent=1 // pred_check_branch
      %40 = sbr.rel (0) target = $region13
    $region12: #{_loss_stats_pallas.1} parent=1 // pred_region
      %42 = dma.done [#allocation6], 128
    $region13: #{_loss_stats_pallas.1} parent=1 // pred_fallthru
      _
    %s43 = sadd.s32 0, 0
    %p44 = scmp.lt.s32.totalorder %s43, 0
    %s45 = scalar_select %p44, %s43, 0
    %p46 = scmp.lt.s32.totalorder %s45, 0
    %s47 = scalar_select %p46, %s45, 0
    %s48 = scalar_lea.vmem %s1, %s47
    %s49 = sadd.s32 0, 0
    %p50 = scmp.lt.s32.totalorder %s49, 0
    %s51 = scalar_select %p50, %s49, 0
    %s52 = sadd.s32 0, 0
    %p53 = scmp.lt.s32.totalorder %s52, 0
    %s54 = scalar_select %p53, %s52, 0
    %p55 = scmp.lt.s32.totalorder %s54, 0
    %s56 = scalar_select %p55, %s54, 0
    %s57 = scalar_lea.vmem %s1, %s56
    %s58 = sadd.s32 0, 0
    %p59 = scmp.lt.s32.totalorder %s58, 0
    %s60 = scalar_select %p59, %s58, 0
    %p61 = scmp.eq.s32.totalorder 0, 0
    // Predicated region
    $region14: #{_loss_stats_pallas.1} parent=1 // pred_check
      %p62 = pneg %p61
    $region15: #{_loss_stats_pallas.1} parent=1 // pred_check_branch
      %64 = sbr.rel (%p62) target = $region17
    $region16: #{_loss_stats_pallas.1} parent=1 // pred_region
      %vm65 = vcmask 516096
      %66 = vst.msk [vmem:[#allocation2] sm:$0x1] %vm65, 0.0
      %vm67 = vcmask 520192
      %68 = vst.msk [vmem:[#allocation3] sm:$0x1f] %vm67, 0.0
      %69 = vst.msk [vmem:[#allocation4] sm:$0x1f] %vm67, 0.0
    $region17: #{_loss_stats_pallas.1} parent=1 // pred_fallthru
      _
    %v70 = vld [vmem:[%s57] sm:$0x1]
    %s71 = sadd.s32 0, 0
    %s72 = smul.u32 %s71, 64
    %v73 = vlaneseq
    %v74 = vand.u32 %v73, 127
    %v75 = vstv %s72
    %v76 = vadd.s32 %v75, %v74
    %vm77 = vcmp.lt.s32.totalorder %v76, 64
    %v78 = vld [vmem:[#allocation5] sm:$0x1f]
    %v79 = vsel %vm77, 1, 0
    %vm80 = vcmp.eq.s32.totalorder %v79, 1
    %v81 = vsel %vm80, %v78, 0.0
    %v82 = vsel %vm77, %v70, 4294967295
    %v83 = vlaneseq
    %v84 = vshrl.u32 %v83, 7
    %v85 = vperm.slane %v82, 0
    %vm86 = vcmp.eq.s32.totalorder %v84, %v85
    %v87 = vsel %vm86, 1, 0
    %v88 = vcvt.s32.f32 %v87
    %vm89 = vcmask 520192
    %v90 = vsel %vm89, %v81, -inf
    %v91 = vrot.slane %v90, 4
    %v92 = vmax.f32 %v90, %v91
    %v93 = vrot.slane %v92, 2
    %v94 = vmax.f32 %v92, %v93
    %v95 = vrot.slane %v94, 1
    %v96 = vmax.f32 %v94, %v95
    %v97 = vsub.f32 %v81, %v96
    %v98 = vmul.f32 %v97, 1.442695
    %v99 = vpow.pop %v98
    %v100 = vsel %vm89, %v99, 0.0
    %v101 = vrot.slane %v100, 4
    %v102 = vadd.f32 %v100, %v101
    %v103 = vrot.slane %v102, 2
    %v104 = vadd.f32 %v102, %v103
    %v105 = vrot.slane %v104, 1
    %v106 = vadd.f32 %v104, %v105
    %v107 = vlog2.pop %v106
    %v108 = vmul.f32 %v107, 0.6931472
    %v109 = vmul.f32 %v97, %v88
    %v110 = vsel %vm89, %v109, 0.0
    %v111 = vrot.slane %v110, 4
    %v112 = vadd.f32 %v110, %v111
    %v113 = vrot.slane %v112, 2
    %v114 = vadd.f32 %v112, %v113
    %v115 = vrot.slane %v114, 1
    %v116 = vadd.f32 %v114, %v115
    %vm117 = vcmp.ge.s32.totalorder %v82, 0
    %vm118 = vcmp.lt.s32.totalorder %v82, 5
    %vm119 = vmand %vm117, %vm118
    %v120 = vsel %vm119, 1, 0
    %v121 = vcvt.s32.f32 %v120
    %vm122 = vcmp.eq.f32.partialorder %v116, 0.0
    %v123 = vsel %vm122, 1, 0
    %v124 = vcvt.s32.f32 %v123
    %v125 = vld [vmem:[#allocation2] sm:$0x1]
    %v126 = vsub.f32 %v108, %v116
    %v127 = vmul.f32 %v126, %v121
    %v128 = vadd.f32 %v125, %v127
    %vm129 = vcmask 516096
    %130 = vst.msk [vmem:[#allocation2] sm:$0x1] %vm129, %v128
    %v131 = vld [vmem:[#allocation4] sm:$0x1f]
    %v132 = vadd.f32 %v131, %v88
    %133 = vst.msk [vmem:[#allocation4] sm:$0x1f] %vm89, %v132
    %v134 = vld [vmem:[#allocation3] sm:$0x1f]
    %v135 = vmul.f32 %v88, %v124
    %v136 = vadd.f32 %v134, %v135
    %137 = vst.msk [vmem:[#allocation3] sm:$0x1f] %vm89, %v136
    // Predicated region
    $region18: #{_loss_stats_pallas.1} parent=1 // pred_check
      %p138 = pneg %p61
    $region19: #{_loss_stats_pallas.1} parent=1 // pred_check_branch
      %140 = sbr.rel (%p138) target = $region21
    $region20: #{_loss_stats_pallas.1} parent=1 // pred_region
      %v141 = vld [vmem:[#allocation2] sm:$0x1]
      %v142 = vsel %vm129, %v141, 0.0
      %143 = vadd.xlane.f32.xlu0 %v142
      %v144 = vpop.xlane.xlu0 %143
      %v145 = vrot.slane %v144, 4
      %v146 = vadd.f32 %v144, %v145
      %v147 = vrot.slane %v146, 2
      %v148 = vadd.f32 %v146, %v147
      %v149 = vrot.slane %v148, 1
      %v150 = vadd.f32 %v148, %v149
      %s151 = vtos %v150
      %v152 = vstv %s151
      %vm153 = vcmask 0
      %154 = vst.msk [vmem:[#allocation8] sm:$0x1] %vm153, %v152
      %v155 = vld [vmem:[#allocation3] sm:$0x1f]
      %v156 = vsel %vm89, %v155, 0.0
      %157 = vadd.xlane.f32.xlu0 %v156
      %v158 = vpop.xlane.xlu0 %157
      %vm159 = vcmask 4096
      %160 = vst.msk [vmem:[%s3] sm:$0x1f] %vm159, %v158
      %v161 = vld [vmem:[#allocation4] sm:$0x1f]
      %v162 = vsel %vm89, %v161, 0.0
      %163 = vadd.xlane.f32.xlu0 %v162
      %v164 = vpop.xlane.xlu0 %163
      %165 = vst.msk [vmem:[%s4] sm:$0x1f] %vm159, %v164
    $region21: #{_loss_stats_pallas.1} parent=1 // pred_fallthru
      _
    // Predicated region
    $region22: #{_loss_stats_pallas.1} parent=1 // pred_check
      _
    $region23: #{_loss_stats_pallas.1} parent=1 // pred_check_branch
      %167 = sbr.rel (0) target = $region25
    $region24: #{_loss_stats_pallas.1} parent=1 // pred_region
      %169 = vsyncadd [#allocation7], 0
      %s171 = sshll.u32 [#allocation8], 4
      %s172 = int_to_ptr.vmem [resolvable:$true] %s171
      %s173 = sshll.u32 %s2, 4
      %s174 = int_to_ptr.hbm [resolvable:$true] %s173
      %176 = dma.vmem_to_hbm [thread:$0]  %s172, 16, %s174, [#allocation7]
    $region25: #{_loss_stats_pallas.1} parent=1 // pred_fallthru
      _
    // Predicated region
    $region26: #{_loss_stats_pallas.1} parent=1 // pred_check
      _
    $region27: #{_loss_stats_pallas.1} parent=1 // pred_check_branch
      %178 = sbr.rel (0) target = $region29
    $region28: #{_loss_stats_pallas.1} parent=1 // pred_region
      _
    $region29: #{_loss_stats_pallas.1} parent=1 // pred_fallthru
      _
    // Predicated region
    $region30: #{_loss_stats_pallas.1} parent=1 // pred_check
      _
    $region31: #{_loss_stats_pallas.1} parent=1 // pred_check_branch
      %180 = sbr.rel (0) target = $region33
    $region32: #{_loss_stats_pallas.1} parent=1 // pred_region
      _
    $region33: #{_loss_stats_pallas.1} parent=1 // pred_fallthru
      _
    // Predicated region
    $region34: #{_loss_stats_pallas.1} parent=1 // pred_check
      _
    $region35: #{_loss_stats_pallas.1} parent=1 // pred_check_branch
      %182 = sbr.rel (0) target = $region37
    $region36: #{_loss_stats_pallas.1} parent=1 // pred_region
      %184 = dma.done [#allocation7], 16
    $region37: #{_loss_stats_pallas.1} parent=1 // pred_fallthru
      _
    // Predicated region
    $region38: #{_loss_stats_pallas.1} parent=1 // pred_check
      _
    $region39: #{_loss_stats_pallas.1} parent=1 // pred_check_branch
      %186 = sbr.rel (0) target = $region41
    $region40: #{_loss_stats_pallas.1} parent=1 // pred_region
      _
    $region41: #{_loss_stats_pallas.1} parent=1 // pred_fallthru
      _
    // Predicated region
    $region42: #{_loss_stats_pallas.1} parent=1 // pred_check
      _
    $region43: #{_loss_stats_pallas.1} parent=1 // pred_check_branch
      %188 = sbr.rel (0) target = $region45
    $region44: #{_loss_stats_pallas.1} parent=1 // pred_region
      _
    $region45: #{_loss_stats_pallas.1} parent=1 // pred_fallthru
      _
    %189 = vsyncpa [#allocation6], 1
    %190 = vsyncpa [#allocation7], 1

</llo_original>
